<compile_context>
chip_gen: v6e
topology: v6e:2x2x1
jax: 0.10.0
libtpu: 0.0.40
codegen_flags: <defaults>
</compile_context>

<pallas_src>
import functools

import jax
import jax.numpy as jnp
from jax.experimental import pallas as pl
from jax.experimental.pallas import tpu as pltpu  # noqa: F401  (TPU backend)

N_NODES = 4
N_OPS = 8                                    # len(gt.PRIMITIVES)
ROW_SIZES = tuple(i + 2 for i in range(N_NODES))     # (2, 3, 4, 5)
ROWS_PER_CELL = sum(ROW_SIZES)                        # 14
R_TOTAL = 2 * ROWS_PER_CELL                           # 28 (normal + reduce)


# ----------------------------------------------------------------------------
# Pallas kernel: masked softmax-style weight generation (generate_weights)
# Layout: ops (K=8) on sublanes, all alpha rows (R=28) on lanes -> one vreg.
# ----------------------------------------------------------------------------
def _masked_weight_kernel(alpha_ref, mask_ref, w_ref, r_ref):
    a = alpha_ref[...]                                   # (K, R) float32
    m = mask_ref[...]                                    # (K, R) float32 {0,1}
    a_max = jnp.max(a, axis=0, keepdims=True)            # (1, R) — stability
    e = jnp.exp(a - a_max)                               # EUP exp; max cancels
    denom_masked = jnp.sum(e * m, axis=0, keepdims=True)  # (1, R)
    denom_full = jnp.sum(e, axis=0, keepdims=True)         # (1, R)
    inv_masked = pl.reciprocal(denom_masked, approx=True)  # EUP vrcp
    inv_full = pl.reciprocal(denom_full, approx=True)
    w_ref[...] = e * inv_masked                             # (K, R)
    r_ref[...] = denom_masked * inv_full                    # (1, R) lane-dense


def generate_weights_pallas(alpha_t, mask_t):
    """alpha_t, mask_t: (N_OPS, R_TOTAL) float32 (ops on sublanes, rows on lanes)."""
    k, r = alpha_t.shape
    nbytes = (3 * k * r + r) * 4  # 2 inputs + 2 outputs, f32
    w_t, ratio_row = pl.pallas_call(
        _masked_weight_kernel,
        out_shape=(
            jax.ShapeDtypeStruct((k, r), jnp.float32),
            jax.ShapeDtypeStruct((1, r), jnp.float32),
        ),
        cost_estimate=pl.CostEstimate(
            flops=10 * k * r,
            transcendentals=k * r + 2 * r,
            bytes_accessed=nbytes,
        ),
    )(alpha_t, mask_t)
    return w_t, ratio_row


# ----------------------------------------------------------------------------
# On-device mask generation (mirrors generate_masks semantics):
# two groups of 4 ops per row, drop prob = drop_rate ** (1/4), each group
# guaranteed at least one kept op.  The original uses host-side rejection
# sampling; here an empty group force-keeps its argmax-uniform op (same
# guarantee, fully traceable, no host serialization).
# ----------------------------------------------------------------------------
def _generate_masks_device(key, drop_rate):
    drop_prob = drop_rate ** 0.25
    u = jax.random.uniform(key, (R_TOTAL, 2, 4), jnp.float32)
    keep = u > drop_prob                                    # (R, 2, 4) bool
    any_kept = jnp.any(keep, axis=-1, keepdims=True)        # (R, 2, 1)
    forced = jnp.arange(4) == jnp.argmax(u, axis=-1, keepdims=True)
    keep = jnp.where(any_kept, keep, forced)
    return keep.reshape(R_TOTAL, N_OPS).astype(jnp.float32)  # (R, 8)


def _split_rows(flat):
    """Split a (R_TOTAL, ...) array into the 8 per-alpha pieces (2,3,4,5)x2."""
    outs, off = [], 0
    for r in ROW_SIZES * 2:
        outs.append(flat[off:off + r])
        off += r
    return outs


# ----------------------------------------------------------------------------
# Single jitted device step: masks -> concat -> Pallas kernel -> slice.
# ----------------------------------------------------------------------------
@jax.jit
def _controller_device_step(key, alphas_normal, alphas_reduce, drop_rate):
    alpha_flat = jnp.concatenate(
        [a.astype(jnp.float32) for a in list(alphas_normal) + list(alphas_reduce)],
        axis=0)                                           # (R_TOTAL, N_OPS)
    mask_flat = _generate_masks_device(key, drop_rate)     # (R_TOTAL, N_OPS)

    w_t, ratio_row = generate_weights_pallas(alpha_flat.T, mask_flat.T)
    w_flat = w_t.T                                          # (R_TOTAL, N_OPS)
    ratio_flat = ratio_row[0]                               # (R_TOTAL,)

    weights = _split_rows(w_flat)
    masks = _split_rows(mask_flat)
    ratios = _split_rows(ratio_flat)
    n = N_NODES
    return (weights[:n], weights[n:], masks[:n], masks[n:], ratios[:n], ratios[n:])


# ----------------------------------------------------------------------------
# Parameter init (matches torch module: 0.001 * randn(i + 2, n_ops))
# ----------------------------------------------------------------------------
def init_alphas(key, n_nodes=N_NODES, n_ops=N_OPS):
    alphas_normal, alphas_reduce = [], []
    for i in range(n_nodes):
        key, k1, k2 = jax.random.split(key, 3)
        alphas_normal.append(0.001 * jax.random.normal(k1, (i + 2, n_ops), jnp.float32))
        alphas_reduce.append(0.001 * jax.random.normal(k2, (i + 2, n_ops), jnp.float32))
    return alphas_normal, alphas_reduce


# ----------------------------------------------------------------------------
# Controller forward
# ----------------------------------------------------------------------------
def dropnas_controller_forward(x, alphas_normal, alphas_reduce, drop_rate, key):
    (weights_normal, weights_reduce,
     masks_normal, masks_reduce,
     ratios_normal, ratios_reduce) = _controller_device_step(
        key, alphas_normal, alphas_reduce, jnp.float32(drop_rate))

    # TODO(synk): return self.net(x, weights_normal, weights_reduce,
    # masks_normal, masks_reduce) once a SearchCNN backbone is supplied.
    return {
        "weights_normal": weights_normal,
        "weights_reduce": weights_reduce,
        "masks_normal": masks_normal,
        "masks_reduce": masks_reduce,
        "ratios_normal": ratios_normal,
        "ratios_reduce": ratios_reduce,
        "x": x,
    }


# ----------------------------------------------------------------------------
# Plain-JAX reference for correctness checking
# ----------------------------------------------------------------------------
def _reference_weights(alpha, mask):
    a = alpha.astype(jnp.float32)
    e = jnp.exp(a - jnp.max(a, axis=-1, keepdims=True))
    denom_m = jnp.sum(e * mask, axis=-1, keepdims=True)
    denom_f = jnp.sum(e, axis=-1, keepdims=True)
    return e / denom_m, (denom_m / denom_f)[:, 0]


if __name__ == "__main__":
    key = jax.random.PRNGKey(0)
    key, kx, ka, km = jax.random.split(key, 4)

    x = jax.random.normal(kx, (2, 4, 16, 16), jnp.float32)   # NCHW, passed through
    alphas_normal, alphas_reduce = init_alphas(ka)
    drop_rate = 0.2

    out = dropnas_controller_forward(x, alphas_normal, alphas_reduce, drop_rate, km)
    jax.block_until_ready(out)

    # --- correctness checks against a plain-JAX reference ---
    # approx reciprocal on the EUP -> allow a slightly loosened tolerance.
    tol = dict(rtol=5e-3, atol=5e-3)
    ok = True
    for alphas, masks, weights, ratios in (
        (alphas_normal, out["masks_normal"], out["weights_normal"], out["ratios_normal"]),
        (alphas_reduce, out["masks_reduce"], out["weights_reduce"], out["ratios_reduce"]),
    ):
        for a, m, w, r in zip(alphas, masks, weights, ratios):
            w_ref, r_ref = _reference_weights(a, m)
            ok &= bool(jnp.allclose(w, w_ref, **tol))
            ok &= bool(jnp.allclose(r, r_ref, **tol))
            # masked weights must sum to 1 per row; ratios in (0, 1]
            ok &= bool(jnp.allclose(jnp.sum(w * m, axis=-1), 1.0, **tol))
            ok &= bool(jnp.all((r > 0.0) & (r <= 1.0 + 5e-3)))
            # each group of 4 ops keeps at least one op
            grp = m.reshape(m.shape[0], 2, 4).sum(axis=-1)
            ok &= bool(jnp.all(grp > 0))

    if not ok:
        raise AssertionError("Pallas masked-weight kernel mismatch vs reference")
    print("KERNEL_OK")
</pallas_src>

<mosaic_0001>
module attributes {stable_mosaic.version = 11 : i64} {
  func.func @_masked_weight_kernel(%arg0: memref<8x28xf32, #tpu.memory_space<vmem>>, %arg1: memref<8x28xf32, #tpu.memory_space<vmem>>, %arg2: memref<8x28xf32, #tpu.memory_space<vmem>>, %arg3: memref<1x28xf32, #tpu.memory_space<vmem>>) attributes {dimension_semantics = [], scalar_prefetch = 0 : i64, scratch_operands = 0 : i64, tpu.core_type = #tpu.core_type<tc>} {
    %c0 = arith.constant 0 : index
    %c0_0 = arith.constant 0 : index
    %0 = vector.load %arg0[%c0, %c0_0] : memref<8x28xf32, #tpu.memory_space<vmem>>, vector<8x28xf32>
    %c0_1 = arith.constant 0 : index
    %c0_2 = arith.constant 0 : index
    %1 = vector.load %arg1[%c0_1, %c0_2] : memref<8x28xf32, #tpu.memory_space<vmem>>, vector<8x28xf32>
    %cst = arith.constant dense<0xFF800000> : vector<28xf32>
    %2 = vector.multi_reduction <maximumf>, %0, %cst [0] : vector<8x28xf32> to vector<28xf32>
    %3 = vector.shape_cast %2 : vector<28xf32> to vector<1x28xf32>
    %4 = vector.broadcast %3 : vector<1x28xf32> to vector<8x28xf32>
    %5 = arith.subf %0, %4 : vector<8x28xf32>
    %6 = math.exp %5 : vector<8x28xf32>
    %7 = arith.mulf %6, %1 : vector<8x28xf32>
    %cst_3 = arith.constant dense<0.000000e+00> : vector<28xf32>
    %8 = vector.multi_reduction <add>, %7, %cst_3 [0] : vector<8x28xf32> to vector<28xf32>
    %9 = vector.shape_cast %8 : vector<28xf32> to vector<1x28xf32>
    %cst_4 = arith.constant dense<0.000000e+00> : vector<28xf32>
    %10 = vector.multi_reduction <add>, %6, %cst_4 [0] : vector<8x28xf32> to vector<28xf32>
    %11 = vector.shape_cast %10 : vector<28xf32> to vector<1x28xf32>
    %12 = tpu.reciprocal %9 {approx = true} : vector<1x28xf32> -> vector<1x28xf32>
    %13 = tpu.reciprocal %11 {approx = true} : vector<1x28xf32> -> vector<1x28xf32>
    %14 = vector.broadcast %12 : vector<1x28xf32> to vector<8x28xf32>
    %15 = arith.mulf %6, %14 : vector<8x28xf32>
    %c0_5 = arith.constant 0 : index
    %c0_6 = arith.constant 0 : index
    %16 = vector.load %arg2[%c0_5, %c0_6] : memref<8x28xf32, #tpu.memory_space<vmem>>, vector<8x28xf32>
    tpu.vector_store %arg2[%c0_5, %c0_6], %15 {strides = array<i32>} : memref<8x28xf32, #tpu.memory_space<vmem>>, vector<8x28xf32>,
    %17 = arith.mulf %9, %13 : vector<1x28xf32>
    %c0_7 = arith.constant 0 : index
    %c0_8 = arith.constant 0 : index
    %18 = vector.load %arg3[%c0_7, %c0_8] : memref<1x28xf32, #tpu.memory_space<vmem>>, vector<1x28xf32>
    tpu.vector_store %arg3[%c0_7, %c0_8], %17 {strides = array<i32>} : memref<1x28xf32, #tpu.memory_space<vmem>>, vector<1x28xf32>,
    return
  }
}

</mosaic_0001>

<llo_original>
// kernel: _controller_device_step.1
$region0: #{_controller_device_step.1}
  #allocation0 [shape = 'u32[]', space=smem, size = 0x4, offset = 0x4, fixed_abs, tag = 'smem constant byte address 0x4 - core index']
  #allocation1 [shape = 'u32[144,128]{1,0:T(1,128)}', space=vmem, size = 0x12000, scoped, tag = 'internal scratch']
  %s0 = inlined_call_operand.vmem [shape: f32[8,28], index: 0, kind: input, shape index: {}]
  %s1 = inlined_call_operand.vmem [shape: f32[8,28], index: 1, kind: input, shape index: {}]
  %s2 = inlined_call_operand.vmem [shape: f32[8,28], index: 2, kind: output, shape index: {0}]
  %s3 = inlined_call_operand.vmem [shape: f32[1,28], index: 3, kind: output, shape index: {1}]
  %4 = xla_tuple %s2, %s3
  %s5 = sld [smem:[#allocation0]]
  $region26: #{_controller_device_step.1} parent=0
    _
  %s7 = ssub.s32 1, %s5
  %s8 = scalar_select 0, %s7, %s5
  // Predicated region
  $region2: #{_controller_device_step.1} parent=0 // pred_check
    _
  $region3: #{_controller_device_step.1} parent=0 // pred_check_branch
    %10 = sbr.rel (0) target = $region5
  $region4: #{_controller_device_step.1} parent=0 // pred_region
    _
  $region5: #{_controller_device_step.1} parent=0 // pred_fallthru
    _
  // Predicated region
  $region6: #{_controller_device_step.1} parent=0 // pred_check
    _
  $region7: #{_controller_device_step.1} parent=0 // pred_check_branch
    %12 = sbr.rel (0) target = $region9
  $region8: #{_controller_device_step.1} parent=0 // pred_region
    _
  $region9: #{_controller_device_step.1} parent=0 // pred_fallthru
    _
  %v13 = vld [vmem:[%s0] sm:$0xff]
  %v14 = vld [vmem:[%s1] sm:$0xff]
  %vm15 = vcmask 228352
  %v16 = vsel %vm15, %v13, -inf
  %v17 = vrot.slane %v16, 4
  %v18 = vmax.f32 %v16, %v17
  %v19 = vrot.slane %v18, 2
  %v20 = vmax.f32 %v18, %v19
  %v21 = vrot.slane %v20, 1
  %v22 = vmax.f32 %v20, %v21
  %v23 = vsub.f32 %v13, %v22
  %v24 = vmul.f32 %v23, 1.442695
  %v25 = vpow.pop %v24
  %v26 = vmul.f32 %v25, %v14
  %v27 = vsel %vm15, %v26, 0.0
  %v28 = vrot.slane %v27, 4
  %v29 = vadd.f32 %v27, %v28
  %v30 = vrot.slane %v29, 2
  %v31 = vadd.f32 %v29, %v30
  %v32 = vrot.slane %v31, 1
  %v33 = vadd.f32 %v31, %v32
  %v34 = vsel %vm15, %v25, 0.0
  %v35 = vrot.slane %v34, 4
  %v36 = vadd.f32 %v34, %v35
  %v37 = vrot.slane %v36, 2
  %v38 = vadd.f32 %v36, %v37
  %v39 = vrot.slane %v38, 1
  %v40 = vadd.f32 %v38, %v39
  %v41 = vrcp.pop %v33
  %v42 = vrcp.pop %v40
  %v43 = vmul.f32 %v25, %v41
  %44 = vst.msk [vmem:[%s2] sm:$0xff] %vm15, %v43
  %v45 = vmul.f32 %v33, %v42
  %vm46 = vcmask 221184
  %47 = vst.msk [vmem:[%s3] sm:$0x1] %vm46, %v45
  // Predicated region
  $region10: #{_controller_device_step.1} parent=0 // pred_check
    _
  $region11: #{_controller_device_step.1} parent=0 // pred_check_branch
    %49 = sbr.rel (0) target = $region13
  $region12: #{_controller_device_step.1} parent=0 // pred_region
    _
  $region13: #{_controller_device_step.1} parent=0 // pred_fallthru
    _
  // Predicated region
  $region14: #{_controller_device_step.1} parent=0 // pred_check
    _
  $region15: #{_controller_device_step.1} parent=0 // pred_check_branch
    %51 = sbr.rel (0) target = $region17
  $region16: #{_controller_device_step.1} parent=0 // pred_region
    _
  $region17: #{_controller_device_step.1} parent=0 // pred_fallthru
    _
  // Predicated region
  $region18: #{_controller_device_step.1} parent=0 // pred_check
    _
  $region19: #{_controller_device_step.1} parent=0 // pred_check_branch
    %53 = sbr.rel (0) target = $region21
  $region20: #{_controller_device_step.1} parent=0 // pred_region
    _
  $region21: #{_controller_device_step.1} parent=0 // pred_fallthru
    _
  // Predicated region
  $region22: #{_controller_device_step.1} parent=0 // pred_check
    _
  $region23: #{_controller_device_step.1} parent=0 // pred_check_branch
    %55 = sbr.rel (0) target = $region25
  $region24: #{_controller_device_step.1} parent=0 // pred_region
    _
  $region25: #{_controller_device_step.1} parent=0 // pred_fallthru
    _

</llo_original>
